<compile_context>
chip_gen: v7x
topology: tpu7x:2x2x1
jax: 0.10.0
libtpu: 0.0.40
codegen_flags: <defaults>
</compile_context>

<pallas_src>
import jax
import jax.numpy as jnp
from jax.experimental import pallas as pl
from jax.experimental.pallas import tpu as pltpu


def _make_entropy_kernel(n_valid: int, block_rows: int):
    """Kernel computing the masked sum of per-row softmax entropies of one tile."""

    def kernel(logits_ref, psum_ref):
        i = pl.program_id(0)
        x = logits_ref[...]                                   # (tb, C) input dtype
        # Row max in the input dtype (max/compare is exact in bf16); cast after.
        m = jnp.max(x, axis=-1, keepdims=True)                # (tb, 1)
        z = x.astype(jnp.float32) - m.astype(jnp.float32)     # (tb, C) f32
        e = jnp.exp(z)                                        # only per-elem transcendental
        denom = jnp.sum(e, axis=-1, keepdims=True)            # (tb, 1)
        s = jnp.sum(e * z, axis=-1, keepdims=True)            # (tb, 1)
        # -sum_j p_j * log p_j == log(denom) - (sum_j e_j * z_j) / denom
        ent = jnp.log(denom) - s / denom                      # (tb, 1)
        # Mask padded rows (required: we emit partial sums, not per-row values).
        row = i * block_rows + jax.lax.broadcasted_iota(jnp.int32, ent.shape, 0)
        ent = jnp.where(row < n_valid, ent, 0.0)
        tile_sum = jnp.sum(ent, axis=0, keepdims=True)        # (1, 1)
        psum_ref[...] = jnp.broadcast_to(tile_sum.reshape(1, 1, 1), psum_ref.shape)

    return kernel


def _vmem_capacity_bytes() -> int:
    try:
        return int(pltpu.get_tpu_info().vmem_capacity_bytes)
    except Exception:
        return 64 << 20  # conservative: v7x per-core physical VMEM


def _round_up(x: int, m: int) -> int:
    return ((x + m - 1) // m) * m


def _choose_block_rows(n: int, c: int, itemsize: int, vmem_cap: int) -> int:
    """Bytes-only tile sizing that accounts for the in-kernel f32 upcast."""
    # Per-row VMEM footprint of a tile:
    #   2 * c * itemsize : double-buffered input DMA (native dtype)
    #   3 * c * 4        : f32 temporaries inside the body (z, e, e*z)
    per_row = 2 * c * itemsize + 3 * c * 4
    budget = vmem_cap // 2                      # keep half of VMEM as headroom
    rows = max(8, budget // per_row)            # no artificial row cap
    # Guarantee >= 2 grid tiles whenever possible so both v7x TCs get work.
    if n > 8:
        rows = min(rows, _round_up(pl.cdiv(n, 2), 8))
    if rows >= n:
        return n                                # whole batch in one full-dim tile
    return max(8, (rows // 8) * 8)              # sublane dim multiple of 8


def confidence_penalty_loss(logits: jax.Array, beta: float = 0.1,
                            block_rows: int | None = None) -> jax.Array:
    """Pallas implementation of ConfidencePenaltyLoss.forward."""
    n, c = logits.shape
    itemsize = jnp.dtype(logits.dtype).itemsize
    vmem_cap = _vmem_capacity_bytes()
    if block_rows is None:
        block_rows = _choose_block_rows(n, c, itemsize, vmem_cap)

    num_tiles = pl.cdiv(n, block_rows)
    n_pad = num_tiles * block_rows
    if n_pad != n:
        # Zero-pad ragged batches; padded rows are masked inside the kernel.
        logits = jnp.pad(logits, ((0, n_pad - n), (0, 0)))

    block_in_bytes = block_rows * c * itemsize
    f32_tmp_bytes = 3 * block_rows * c * 4
    needed = 2 * block_in_bytes + f32_tmp_bytes + (2 << 20)
    vmem_limit = int(min(max(needed, 32 << 20), (vmem_cap * 3) // 4))

    kernel = _make_entropy_kernel(n, block_rows)
    partials = pl.pallas_call(
        kernel,
        out_shape=jax.ShapeDtypeStruct((num_tiles, 8, 128), jnp.float32),
        grid_spec=pltpu.PrefetchScalarGridSpec(
            num_scalar_prefetch=0,
            grid=(num_tiles,),
            in_specs=[pl.BlockSpec((block_rows, c), lambda i: (i, 0))],
            out_specs=pl.BlockSpec((1, 8, 128), lambda i: (i, 0, 0)),
        ),
        compiler_params=pltpu.CompilerParams(
            dimension_semantics=("parallel",),   # independent tiles -> megacore on v7x
            vmem_limit_bytes=vmem_limit,
        ),
    )(logits)

    # Tiny finish in plain JAX: sum num_tiles partials, mean over valid rows, -beta.
    return (-beta / n) * jnp.sum(partials[:, 0, 0])


def _reference(logits: jax.Array, beta: float = 0.1) -> jax.Array:
    probs = jax.nn.softmax(logits.astype(jnp.float32), axis=1)
    entropy = -jnp.sum(probs * jnp.log(probs + 1e-8), axis=1)
    return -beta * jnp.mean(entropy)


if __name__ == "__main__":
    key = jax.random.PRNGKey(0)
    beta = 0.1

    # 1) f32, auto-sized blocks -> 2 tiles (both TCs on v7x), no padding.
    batch, num_classes = 16, 32
    logits = jax.random.normal(key, (batch, num_classes), dtype=jnp.float32) * 3.0
    loss = jax.block_until_ready(confidence_penalty_loss(logits, beta=beta))
    ref = _reference(logits, beta=beta)
    assert jnp.allclose(loss, ref, atol=1e-5, rtol=1e-5), (loss, ref)

    # 2) Ragged batch (in-kernel padding mask) with an explicit multi-tile grid.
    batch2 = 37
    logits2 = jax.random.normal(jax.random.PRNGKey(1), (batch2, num_classes),
                                dtype=jnp.float32) * 2.0
    loss2 = jax.block_until_ready(
        confidence_penalty_loss(logits2, beta=beta, block_rows=8))
    ref2 = _reference(logits2, beta=beta)
    assert jnp.allclose(loss2, ref2, atol=1e-5, rtol=1e-5), (loss2, ref2)

    # 3) bf16 logits stream through the BlockSpec in bf16; max in bf16, rest f32.
    logits3 = (jax.random.normal(jax.random.PRNGKey(2), (8, num_classes),
                                 dtype=jnp.float32) * 2.0).astype(jnp.bfloat16)
    loss3 = jax.block_until_ready(confidence_penalty_loss(logits3, beta=beta))
    ref3 = _reference(logits3, beta=beta)
    assert jnp.allclose(loss3, ref3, atol=1e-4, rtol=1e-4), (loss3, ref3)

    print("KERNEL_OK")
</pallas_src>

<mosaic_0001>
module attributes {stable_mosaic.version = 11 : i64} {
  func.func @kernel(%arg0: i32, %arg1: memref<8x32xf32, #tpu.memory_space<vmem>>, %arg2: memref<1x8x128xf32, #tpu.memory_space<vmem>>) attributes {dimension_semantics = [#tpu.dimension_semantics<parallel>], iteration_bounds = array<i64: 2>, scalar_prefetch = 0 : i64, scratch_operands = 0 : i64, tpu.core_type = #tpu.core_type<tc>, window_params = [{transform_indices = @transform_0, window_bounds = array<i64: 8, 32>}, {transform_indices = @transform_1, window_bounds = array<i64: 1, 8, 128>}]} {
    %c0 = arith.constant 0 : index
    %c0_0 = arith.constant 0 : index
    %0 = vector.load %arg1[%c0, %c0_0] : memref<8x32xf32, #tpu.memory_space<vmem>>, vector<8x32xf32>
    %cst = arith.constant dense<0xFF800000> : vector<8xf32>
    %1 = vector.multi_reduction <maximumf>, %0, %cst [1] : vector<8x32xf32> to vector<8xf32>
    %2 = vector.shape_cast %1 : vector<8xf32> to vector<8x1xf32>
    %3 = vector.broadcast %2 : vector<8x1xf32> to vector<8x32xf32>
    %4 = arith.subf %0, %3 : vector<8x32xf32>
    %5 = math.exp %4 : vector<8x32xf32>
    %cst_1 = arith.constant dense<0.000000e+00> : vector<8xf32>
    %6 = vector.multi_reduction <add>, %5, %cst_1 [1] : vector<8x32xf32> to vector<8xf32>
    %7 = vector.shape_cast %6 : vector<8xf32> to vector<8x1xf32>
    %8 = arith.mulf %5, %4 : vector<8x32xf32>
    %cst_2 = arith.constant dense<0.000000e+00> : vector<8xf32>
    %9 = vector.multi_reduction <add>, %8, %cst_2 [1] : vector<8x32xf32> to vector<8xf32>
    %10 = vector.shape_cast %9 : vector<8xf32> to vector<8x1xf32>
    %11 = math.log %7 : vector<8x1xf32>
    %12 = arith.divf %10, %7 : vector<8x1xf32>
    %13 = arith.subf %11, %12 : vector<8x1xf32>
    %c8_i32 = arith.constant 8 : i32
    %14 = arith.muli %arg0, %c8_i32 : i32
    %15 = tpu.iota {dimensions = array<i32: 0>} : vector<8x1xi32>
    %16 = vector.broadcast %14 : i32 to vector<8x1xi32>
    %17 = arith.addi %16, %15 : vector<8x1xi32>
    %c16_i32 = arith.constant 16 : i32
    %18 = vector.broadcast %c16_i32 : i32 to vector<8x1xi32>
    %19 = arith.cmpi slt, %17, %18 : vector<8x1xi32>
    %cst_3 = arith.constant 0.000000e+00 : f32
    %20 = vector.broadcast %cst_3 : f32 to vector<8x1xf32>
    %21 = arith.select %19, %13, %20 : vector<8x1xi1>, vector<8x1xf32>
    %cst_4 = arith.constant dense<0.000000e+00> : vector<1xf32>
    %22 = vector.multi_reduction <add>, %21, %cst_4 [0] : vector<8x1xf32> to vector<1xf32>
    %23 = vector.shape_cast %22 : vector<1xf32> to vector<1x1xf32>
    %24 = vector.shape_cast %23 : vector<1x1xf32> to vector<1x1x1xf32>
    %25 = vector.shape_cast %24 : vector<1x1x1xf32> to vector<1x1x1xf32>
    %26 = vector.broadcast %25 : vector<1x1x1xf32> to vector<1x8x128xf32>
    %c0_5 = arith.constant 0 : index
    %c0_6 = arith.constant 0 : index
    %c0_7 = arith.constant 0 : index
    %27 = vector.load %arg2[%c0_5, %c0_6, %c0_7] : memref<1x8x128xf32, #tpu.memory_space<vmem>>, vector<1x8x128xf32>
    tpu.vector_store %arg2[%c0_5, %c0_6, %c0_7], %26 {strides = array<i32>} : memref<1x8x128xf32, #tpu.memory_space<vmem>>, vector<1x8x128xf32>,
    return
  }
  func.func @transform_0(%arg0: i32) -> (i32, i32) {
    %c0_i32 = arith.constant 0 : i32
    %c0_i32_0 = arith.constant 0 : i32
    return %arg0, %c0_i32 : i32, i32
  }
  func.func @transform_1(%arg0: i32) -> (i32, i32, i32) {
    %c0_i32 = arith.constant 0 : i32
    %c0_i32_0 = arith.constant 0 : i32
    %c0_i32_1 = arith.constant 0 : i32
    return %arg0, %c0_i32, %c0_i32_0 : i32, i32, i32
  }
}

</mosaic_0001>

<llo_original>
// kernel: tpu_custom_call.1
$region0: #{tpu_custom_call.1}
  #allocation0 [shape = 'u32[]', space=smem, size = 0x4, offset = 0x4, fixed_abs, tag = 'smem constant byte address 0x4 - core index']
  #allocation1 [shape = 'u32[144,128]{1,0:T(1,128)}', space=vmem, size = 0x12000, scoped, tag = 'internal scratch']
  %s0 = inlined_call_operand.hbm [shape: f32[16,32], index: 0, kind: input, shape index: {}]
  %s1 = inlined_call_operand.hbm [shape: f32[2,8,128], index: 1, kind: output, shape index: {}]
  %s2 = sld [smem:[#allocation0]]
  $region41: #{tpu_custom_call.1} parent=0
    _
  %s4 = ssub.s32 1, %s2
  %s5 = scalar_select 0, %s4, %s2
  $region1: #{tpu_custom_call.1} parent=0
    #allocation2 [shape = 'u8[8192]{0}', space=vmem, size = 0x2000, scoped, tag = 'input window, operand 0']
    #allocation3 [shape = 's32[2]{0}', space=sflag, size = 0x8, scoped, tag = 'scoped memory for tpu_custom_call.1']
    #allocation4 [shape = 's32[2]{0}', space=sflag, size = 0x8, scoped, tag = 'scoped memory for tpu_custom_call.1']
    #allocation5 [shape = 'u8[8192]{0}', space=vmem, size = 0x2000, scoped, tag = 'output window, operand 0']
    %6 = vsyncpa [#allocation3], 0
    %s7 = scalar_lea.sflag [#allocation3], 1
    %8 = vsyncpa %s7, 0
    %9 = vsyncpa [#allocation4], 0
    %s10 = scalar_lea.sflag [#allocation4], 1
    %11 = vsyncpa %s10, 0
    loop: start=0, step=1, limit=4
    $region2: #{tpu_custom_call.1} parent=1 // loop_pre_header
      _
    $region3: #{tpu_custom_call.1} parent=1 // loop_header
      %s13 = sphi 0, %s17
      %p14 = scmp.ge.s32.totalorder %s13, 4
      %s23 = sphi 0, %s25
      %s26 = sphi 0, %s23
      %s27 = sphi 0, %s26
      %s43 = sphi 0, %s27
      %s49 = sphi 0, %s51
      %s52 = sphi 0, %s49
      %s53 = sphi 0, %s52
      %s69 = sphi 0, %s53
    $region4: #{tpu_custom_call.1} parent=1 // loop_header_branch
      %16 = sbr.rel (%p14) target = $region8
    $region5: #{tpu_custom_call.1} parent=1 // loop_body
      %s18 = ssub.s32 %s13, 1
      %s19 = ssub.s32 %s13, 2
      %s20 = sadd.s32 %s13, 1
      %s21 = ssub.s32 %s13, %s20
      %p22 = scmp.eq.s32.totalorder %s21, 0
      %s24 = sadd.s32 %s23, 1
      %s25 = scalar_select %p22, %s23, %s24
      %p28 = pneg %p22
      %p29 = scmp.eq.s32.totalorder %s13, 1
      %p30 = por %p28, %p29
      %p31 = scmp.ne.s32.totalorder %s23, %s26
      %p32 = scmp.eq.s32.totalorder %s13, 0
      %p33 = por %p31, %p32
      %p34 = scmp.ne.s32.totalorder %s23, %s26
      %p35 = scmp.eq.s32.totalorder %s18, 1
      %p36 = por %p34, %p35
      %p37 = scmp.ne.s32.totalorder %s26, %s27
      %p38 = scmp.eq.s32.totalorder %s18, 0
      %p39 = por %p37, %p38
      %p40 = scmp.ne.s32.totalorder %s26, %s27
      %p41 = scmp.eq.s32.totalorder %s19, 1
      %p42 = por %p40, %p41
      %p44 = scmp.ne.s32.totalorder %s27, %s43
      %p45 = scmp.eq.s32.totalorder %s19, 0
      %p46 = por %p44, %p45
      %s47 = ssub.s32 %s13, %s20
      %p48 = scmp.eq.s32.totalorder %s47, 0
      %s50 = sadd.s32 %s49, 1
      %s51 = scalar_select %p48, %s49, %s50
      %p54 = pneg %p48
      %p55 = scmp.eq.s32.totalorder %s13, 1
      %p56 = por %p54, %p55
      %p57 = scmp.ne.s32.totalorder %s49, %s52
      %p58 = scmp.eq.s32.totalorder %s13, 0
      %p59 = por %p57, %p58
      %p60 = scmp.ne.s32.totalorder %s49, %s52
      %p61 = scmp.eq.s32.totalorder %s18, 1
      %p62 = por %p60, %p61
      %p63 = scmp.ne.s32.totalorder %s52, %s53
      %p64 = scmp.eq.s32.totalorder %s18, 0
      %p65 = por %p63, %p64
      %p66 = scmp.ne.s32.totalorder %s52, %s53
      %p67 = scmp.eq.s32.totalorder %s19, 1
      %p68 = por %p66, %p67
      %p70 = scmp.ne.s32.totalorder %s53, %s69
      %p71 = scmp.eq.s32.totalorder %s19, 0
      %p72 = por %p70, %p71
      %p73 = scmp.le.s32.totalorder 1, %s13
      %p74 = scmp.lt.s32.totalorder %s13, 3
      %p75 = pnand %p73, %p74
      %p76 = pneg %p75
      // Predicated region
      $region9: #{tpu_custom_call.1} parent=5 // pred_check
        _
      $region10: #{tpu_custom_call.1} parent=5 // pred_check_branch
        %78 = sbr.rel (%p75) target = $region12
      $region11: #{tpu_custom_call.1} parent=5 // pred_region
        %s79 = ssub.s32 %s13, 1
      $region12: #{tpu_custom_call.1} parent=5 // pred_fallthru
        _
      %p80 = scmp.lt.s32.totalorder %s13, 2
      // Predicated region
      $region13: #{tpu_custom_call.1} parent=5 // pred_check
        %p81 = pneg %p80
      $region14: #{tpu_custom_call.1} parent=5 // pred_check_branch
        %83 = sbr.rel (%p81) target = $region16
      $region15: #{tpu_custom_call.1} parent=5 // pred_region
        // Predicated region
        $region17: #{tpu_custom_call.1} parent=15 // pred_check
          %p84 = pneg %p33
        $region18: #{tpu_custom_call.1} parent=15 // pred_check_branch
          %86 = sbr.rel (%p84) target = $region20
        $region19: #{tpu_custom_call.1} parent=15 // pred_region
          %s87 = sand.u32 %s23, 1
          %s88 = scalar_lea.sflag [#allocation3], %s87
          %s89 = sand.u32 %s23, 1
          %s90 = smul.addr %s89, 8
          %s91 = scalar_lea.vmem [#allocation2], %s90
          %s93 = ssub.s32 128, 128
          %94 = vsyncadd %s88, %s93
          %s95 = smul.addr %s13, 128
          %s96 = scalar_lea.hbm %s0, %s95
          %s98 = sshll.u32 %s91, 4
          %s99 = int_to_ptr.vmem [resolvable:$true] %s98
          %101 = dma.hbm_to_vmem [thread:$0]  %s96, 128, %s99, %s88
        $region20: #{tpu_custom_call.1} parent=15 // pred_fallthru
          _
      $region16: #{tpu_custom_call.1} parent=5 // pred_fallthru
        _
      %p102 = scmp.le.s32.totalorder 1, %s13
      %p103 = scmp.lt.s32.totalorder %s13, 3
      %p104 = pnand %p102, %p103
      %p105 = pneg %p104
      // Predicated region
      $region21: #{tpu_custom_call.1} parent=5 // pred_check
        _
      $region22: #{tpu_custom_call.1} parent=5 // pred_check_branch
        %107 = sbr.rel (%p104) target = $region24
      $region23: #{tpu_custom_call.1} parent=5 // pred_region
        %s108 = ssub.s32 %s13, 1
        %s109 = sand.u32 %s26, 1
        %s110 = scalar_lea.sflag [#allocation3], %s109
        %s111 = sand.u32 %s26, 1
        %s112 = smul.addr %s111, 8
        %s113 = scalar_lea.vmem [#allocation2], %s112
        // Predicated region
        $region25: #{tpu_custom_call.1} parent=23 // pred_check
          %p114 = pneg %p39
        $region26: #{tpu_custom_call.1} parent=23 // pred_check_branch
          %116 = sbr.rel (%p114) target = $region28
        $region27: #{tpu_custom_call.1} parent=23 // pred_region
          %117 = dma.done %s110, 128
        $region28: #{tpu_custom_call.1} parent=23 // pred_fallthru
          _
        %s118 = sand.u32 %s26, 1
        %s119 = scalar_lea.sflag [#allocation3], %s118
        %s120 = sand.u32 %s26, 1
        %s121 = smul.addr %s120, 8
        %s122 = scalar_lea.vmem [#allocation2], %s121
        %p123 = pneg %p39
        %p124 = pneg %p36
        %p125 = pneg %p65
        %p126 = pneg %p62
        %s127 = sand.u32 %s52, 1
        %s128 = scalar_lea.sflag [#allocation4], %s127
        %s129 = sand.u32 %s52, 1
        %s130 = smul.addr %s129, 8
        %s131 = scalar_lea.vmem [#allocation5], %s130
        %v132 = vld [vmem:[%s113] sm:$0xff]
        %vm133 = vcmask 261120
        %v134 = vsel %vm133, %v132, -inf
        %135 = vmax.xlane.f32.xlu0 %v134
        %v136 = vpop.xlane.xlu0 %135
        %v137 = vsub.f32 %v132, %v136
        %v138 = vmul.f32 %v137, 1.442695
        %v139 = vpow.pop %v138
        %v140 = vsel %vm133, %v139, 0.0
        %141 = vadd.xlane.f32.xlu0 %v140
        %v142 = vpop.xlane.xlu0 %141
        %v143 = vmul.f32 %v139, %v137
        %v144 = vsel %vm133, %v143, 0.0
        %145 = vadd.xlane.f32.xlu0 %v144
        %v146 = vpop.xlane.xlu0 %145
        %v147 = vlog2.pop %v142
        %v148 = vmul.f32 %v147, 0.6931472
        %v149 = vrcp.pop %v142
        %v150 = vmul.f32 %v146, %v149
        %v151 = vsub.f32 %v148, %v150
        %s152 = smul.u32 %s18, 8
        %v153 = vlaneseq
        %v154 = vshrl.u32 %v153, 7
        %v155 = vstv %s152
        %v156 = vadd.s32 %v155, %v154
        %vm157 = vcmp.lt.s32.totalorder %v156, 16
        %v158 = vsel %vm157, %v151, 0.0
        %v159 = vrot.slane %v158, 4
        %v160 = vadd.f32 %v158, %v159
        %v161 = vrot.slane %v160, 2
        %v162 = vadd.f32 %v160, %v161
        %v163 = vrot.slane %v162, 1
        %v164 = vadd.f32 %v162, %v163
        %165 = vst [vmem:[%s131] sm:$0xff] %v164
        %s166 = sand.u32 %s52, 1
        %s167 = scalar_lea.sflag [#allocation4], %s166
        %s168 = sand.u32 %s52, 1
        %s169 = smul.addr %s168, 8
        %s170 = scalar_lea.vmem [#allocation5], %s169
        // Predicated region
        $region29: #{tpu_custom_call.1} parent=23 // pred_check
          %p171 = pneg %p62
        $region30: #{tpu_custom_call.1} parent=23 // pred_check_branch
          %173 = sbr.rel (%p171) target = $region32
        $region31: #{tpu_custom_call.1} parent=23 // pred_region
          %s175 = ssub.s32 128, 128
          %176 = vsyncadd %s167, %s175
          %s177 = smul.addr %s18, 128
          %s178 = scalar_lea.hbm %s1, %s177
          %s180 = sshll.u32 %s170, 4
          %s181 = int_to_ptr.vmem [resolvable:$true] %s180
          %183 = dma.vmem_to_hbm [thread:$0]  %s181, 128, %s178, %s167
        $region32: #{tpu_custom_call.1} parent=23 // pred_fallthru
          _
      $region24: #{tpu_custom_call.1} parent=5 // pred_fallthru
        _
      %p184 = scmp.le.s32.totalorder 2, %s13
      // Predicated region
      $region33: #{tpu_custom_call.1} parent=5 // pred_check
        %p185 = pneg %p184
      $region34: #{tpu_custom_call.1} parent=5 // pred_check_branch
        %187 = sbr.rel (%p185) target = $region36
      $region35: #{tpu_custom_call.1} parent=5 // pred_region
        %s188 = ssub.s32 %s13, 2
        // Predicated region
        $region37: #{tpu_custom_call.1} parent=35 // pred_check
          %p189 = pneg %p68
        $region38: #{tpu_custom_call.1} parent=35 // pred_check_branch
          %191 = sbr.rel (%p189) target = $region40
        $region39: #{tpu_custom_call.1} parent=35 // pred_region
          %s192 = sand.u32 %s53, 1
          %s193 = scalar_lea.sflag [#allocation4], %s192
          %s194 = sand.u32 %s53, 1
          %s195 = smul.addr %s194, 8
          %s196 = scalar_lea.vmem [#allocation5], %s195
          %197 = dma.done %s193, 128
        $region40: #{tpu_custom_call.1} parent=35 // pred_fallthru
          _
      $region36: #{tpu_custom_call.1} parent=5 // pred_fallthru
        _
    $region6: #{tpu_custom_call.1} parent=1 // loop_footer
      %s17 = sadd.s32 1, %s13
    $region7: #{tpu_custom_call.1} parent=1 // loop_footer_branch
      %12 = sbr.rel target = $region3
    $region8: #{tpu_custom_call.1} parent=1 // loop_exit
      _
    %198 = vsyncpa [#allocation3], 1
    %s199 = scalar_lea.sflag [#allocation3], 1
    %200 = vsyncpa %s199, 1
    %201 = vsyncpa [#allocation4], 1
    %s202 = scalar_lea.sflag [#allocation4], 1
    %203 = vsyncpa %s202, 1

</llo_original>
